<compile_context>
chip_gen: v5e
topology: v5e:2x2
jax: 0.10.0
libtpu: 0.0.40
codegen_flags: <defaults>
</compile_context>

<pallas_src>
import functools

import jax
import jax.numpy as jnp
from jax import lax
from jax.experimental import pallas as pl
from jax.experimental.pallas import tpu as pltpu

NEG_INF_FILL = -1.0e9   # value used by torch.masked_fill in the reference
LEAKY_SLOPE = 0.01      # nn.LeakyReLU default negative_slope


def _tma_kernel(bt, L, S, x_ref, pos_ref, w1_ref, b1_ref, w2s_ref, bias_ref, out_ref):
    # x_ref:   (bt, N, H)  seq_output rows for `bt` batch elements (N = L*S)
    # pos_ref: (L, H)      raw position-embedding table rows 0..L-1
    # w1_ref:  (H, H), b1_ref: (1, H)   first Linear (x @ W1 + b1)
    # w2s_ref: (1, H)      second Linear weight row, pre-scaled by 1/tau
    # bias_ref:(bt, 1, N)  additive bias: b2/tau + (-1e9 where item_seq == 0)
    # out_ref: (bt, 1, N)  per-batch softmax over the flattened L*S axis (lane-dense)
    N = L * S
    H = x_ref.shape[-1]
    R = bt * N

    # Expand the (L, H) position table to per-row (N, H) on-chip: row n = l*S + s uses
    # pos[l].  A tiny 0/1 expansion matmul keeps every op in well-supported Mosaic
    # territory and avoids DMAing S x redundant position data from HBM.
    n_idx = lax.broadcasted_iota(jnp.int32, (N, L), 0)
    l_idx = lax.broadcasted_iota(jnp.int32, (N, L), 1)
    expand = ((n_idx >= l_idx * S) & (n_idx < (l_idx + 1) * S)).astype(jnp.float32)
    pos_rows = jnp.dot(expand, pos_ref[...].astype(jnp.float32),
                       preferred_element_type=jnp.float32)            # (N, H)

    x = x_ref[...] + pos_rows[None, :, :]                              # (bt, N, H)
    xf = x.reshape(R, H)                                               # batches stacked on sublanes

    # Linear(H, H) on the MXU (f32 accumulation); Dropout is identity in eval mode.
    h = jnp.dot(xf.astype(w1_ref.dtype), w1_ref[...],
                preferred_element_type=jnp.float32) + b1_ref[...]      # (R, H)
    h = jnp.where(h > 0, h, LEAKY_SLOPE * h)                           # LeakyReLU

    # Linear(H, 1) as VPU multiply + reduce (w2 already carries the 1/tau factor);
    # transposing before the reduce lands the per-row logits lane-dense.
    t = (h * w2s_ref[...]).T                                           # (H, R)
    logit = jnp.sum(t, axis=0, keepdims=True)                          # (1, R) lane-dense
    logit = logit.reshape(bt, 1, N) + bias_ref[...]                    # + b2/tau, -1e9 mask

    # per-batch softmax over the flattened (L*S) axis, along lanes
    m = jnp.max(logit, axis=-1, keepdims=True)
    e = jnp.exp(logit - m)
    s = jnp.sum(e, axis=-1, keepdims=True)
    out_ref[...] = (e / s).astype(out_ref.dtype)


def time_aware_attention(seq_output, item_seq, pos_table, w1, b1, w2, b2, tau,
                         *, block_b=None, matmul_dtype=jnp.float32):
    """Forward pass of TimeAwareAttention.  Returns (B, L, S) attention weights.

    matmul_dtype: set to jnp.bfloat16 on v6e/v7x for higher MXU throughput (f32
    accumulation and f32 softmax are kept); loosens tolerance vs. an f32 reference.
    """
    B, L, S, H = seq_output.shape
    N = L * S

    # ---- host-side glue (free reshapes + tiny constants; no large materialization)
    x = seq_output.reshape(B, N, H)
    w2s = (w2.reshape(1, H).astype(jnp.float32)) / tau                 # fold 1/tau into W2
    bias = jnp.where(item_seq.reshape(B, N) == 0, NEG_INF_FILL, 0.0).astype(jnp.float32)
    bias = (bias + b2.reshape(()).astype(jnp.float32) / tau).reshape(B, 1, N)
    posL = pos_table[:L]                                               # (L, H), expanded on-chip

    # ---- batch tile: ~256 rows/step fills the MXU M dim (use ~128 on v5e), but keep
    # at least two grid steps when B allows it so v7x's 2nd TensorCore gets work.
    if block_b is None:
        block_b = max(1, min(B, 256 // max(N, 1)))
        if B >= 2 and pl.cdiv(B, block_b) < 2:
            block_b = pl.cdiv(B, 2)
    bt = int(block_b)
    steps = pl.cdiv(B, bt)
    Bpad = steps * bt
    if Bpad != B:
        x = jnp.pad(x, ((0, Bpad - B), (0, 0), (0, 0)))
        bias = jnp.pad(bias, ((0, Bpad - B), (0, 0), (0, 0)))

    kernel = functools.partial(_tma_kernel, bt, L, S)
    out = pl.pallas_call(
        kernel,
        out_shape=jax.ShapeDtypeStruct((Bpad, 1, N), jnp.float32),
        grid=(steps,),
        in_specs=[
            pl.BlockSpec((bt, N, H), lambda i: (i, 0, 0)),   # seq_output rows (bt batches)
            pl.BlockSpec((L, H), lambda i: (0, 0)),          # position table (grid-invariant)
            pl.BlockSpec((H, H), lambda i: (0, 0)),          # W1
            pl.BlockSpec((1, H), lambda i: (0, 0)),          # b1
            pl.BlockSpec((1, H), lambda i: (0, 0)),          # W2 / tau (row vector)
            pl.BlockSpec((bt, 1, N), lambda i: (i, 0, 0)),   # additive mask/bias (lane-dense)
        ],
        out_specs=pl.BlockSpec((bt, 1, N), lambda i: (i, 0, 0)),       # lane-dense output
        compiler_params=pltpu.CompilerParams(
            dimension_semantics=("parallel",),
            # blocks here are tiny; a flat 32 MiB ceiling is safe on v5e/v6e/v7x and
            # leaves headroom when bt*N is scaled up (v7x physical VMEM is 64 MiB).
            vmem_limit_bytes=32 * 1024 * 1024,
        ),
    )(x, posL, w1.astype(matmul_dtype), b1.reshape(1, H).astype(jnp.float32), w2s, bias)
    return out[:B, 0, :].reshape(B, L, S)


def reference(seq_output, item_seq, pos_table, w1, b1, w2, b2, tau):
    """Plain-JAX port of the PyTorch forward (eval mode) for verification."""
    B, L, S, H = seq_output.shape
    pos = pos_table[:L][None, :, None, :]                  # (1, L, 1, H)
    x = seq_output + pos
    h = x @ w1 + b1
    h = jnp.where(h > 0, h, LEAKY_SLOPE * h)
    logit = (h @ w2)[..., 0] + b2[0]
    logit = logit / tau
    logit = jnp.where(item_seq == 0, NEG_INF_FILL, logit)
    w = jax.nn.softmax(logit.reshape(B, -1), axis=-1)
    return w.reshape(B, L, S)


if __name__ == "__main__":
    B, L, S, H = 2, 8, 4, 32          # batch, seq_len, aspects, hidden_size
    max_seq_len = 16                  # config['max_seq_len'] >= L
    tau = 0.5                         # config['aspect_k']
    # config['hidden_dropout_prob'] unused in eval mode

    key = jax.random.PRNGKey(0)
    k1, k2, k3, k4, k5, k6, k7 = jax.random.split(key, 7)
    seq_output = jax.random.normal(k1, (B, L, S, H), jnp.float32)
    item_seq = jax.random.randint(k2, (B, L, S), 0, 5, dtype=jnp.int32)  # zeros -> masked
    # deterministic parameter init (shapes per nn.Embedding / nn.Linear in __init__)
    pos_table = 0.02 * jax.random.normal(k3, (max_seq_len, H), jnp.float32)
    w1 = jax.random.normal(k4, (H, H), jnp.float32) / jnp.sqrt(H)   # Linear(H,H) weight.T
    b1 = 0.01 * jax.random.normal(k5, (H,), jnp.float32)
    w2 = jax.random.normal(k6, (H, 1), jnp.float32) / jnp.sqrt(H)   # Linear(H,1) weight.T
    b2 = 0.01 * jax.random.normal(k7, (1,), jnp.float32)

    out = time_aware_attention(seq_output, item_seq, pos_table, w1, b1, w2, b2, tau)
    out = jax.block_until_ready(out)

    ref = reference(seq_output, item_seq, pos_table, w1, b1, w2, b2, tau)
    assert out.shape == (B, L, S), out.shape
    assert jnp.allclose(out, ref, atol=1e-4, rtol=1e-3), \
        f"max abs err {jnp.max(jnp.abs(out - ref))}"
    assert jnp.allclose(jnp.sum(out.reshape(B, -1), axis=-1), 1.0, atol=1e-4)
    print("KERNEL_OK")
</pallas_src>

<mosaic_0001>
module attributes {stable_mosaic.version = 11 : i64} {
  func.func @_tma_kernel(%arg0: i32, %arg1: memref<1x32x32xf32, #tpu.memory_space<vmem>>, %arg2: memref<8x32xf32, #tpu.memory_space<vmem>>, %arg3: memref<32x32xf32, #tpu.memory_space<vmem>>, %arg4: memref<1x32xf32, #tpu.memory_space<vmem>>, %arg5: memref<1x32xf32, #tpu.memory_space<vmem>>, %arg6: memref<1x1x32xf32, #tpu.memory_space<vmem>>, %arg7: memref<1x1x32xf32, #tpu.memory_space<vmem>>) attributes {dimension_semantics = [#tpu.dimension_semantics<parallel>], iteration_bounds = array<i64: 2>, scalar_prefetch = 0 : i64, scratch_operands = 0 : i64, tpu.core_type = #tpu.core_type<tc>, window_params = [{transform_indices = @transform_0, window_bounds = array<i64: 1, 32, 32>}, {pipeline_mode = #tpu.pipeline_mode<synchronous>, transform_indices = @transform_1, window_bounds = array<i64: 8, 32>}, {pipeline_mode = #tpu.pipeline_mode<synchronous>, transform_indices = @transform_2, window_bounds = array<i64: 32, 32>}, {pipeline_mode = #tpu.pipeline_mode<synchronous>, transform_indices = @transform_3, window_bounds = array<i64: 1, 32>}, {pipeline_mode = #tpu.pipeline_mode<synchronous>, transform_indices = @transform_4, window_bounds = array<i64: 1, 32>}, {transform_indices = @transform_5, window_bounds = array<i64: 1, 1, 32>}, {transform_indices = @transform_6, window_bounds = array<i64: 1, 1, 32>}]} {
    %0 = tpu.iota {dimensions = array<i32: 0>} : vector<32x8xi32>
    %1 = tpu.iota {dimensions = array<i32: 1>} : vector<32x8xi32>
    %c4_i32 = arith.constant 4 : i32
    %2 = vector.broadcast %c4_i32 : i32 to vector<32x8xi32>
    %3 = arith.muli %1, %2 : vector<32x8xi32>
    %4 = arith.cmpi sge, %0, %3 : vector<32x8xi32>
    %c1_i32 = arith.constant 1 : i32
    %5 = vector.broadcast %c1_i32 : i32 to vector<32x8xi32>
    %6 = arith.addi %1, %5 : vector<32x8xi32>
    %c4_i32_0 = arith.constant 4 : i32
    %7 = vector.broadcast %c4_i32_0 : i32 to vector<32x8xi32>
    %8 = arith.muli %6, %7 : vector<32x8xi32>
    %9 = arith.cmpi slt, %0, %8 : vector<32x8xi32>
    %10 = arith.andi %4, %9 : vector<32x8xi1>
    %11 = arith.extui %10 : vector<32x8xi1> to vector<32x8xi32>
    %12 = arith.sitofp %11 : vector<32x8xi32> to vector<32x8xf32>
    %c0 = arith.constant 0 : index
    %c0_1 = arith.constant 0 : index
    %13 = vector.load %arg2[%c0, %c0_1] : memref<8x32xf32, #tpu.memory_space<vmem>>, vector<8x32xf32>
    %cst = arith.constant dense<0.000000e+00> : vector<32x32xf32>
    %14 = tpu.matmul %12, %13, %cst {dimension_numbers = #tpu.dot_dimension_numbers<[1], [0], [0], [1], [0, 0, 1, 1], [], []>} : vector<32x8xf32>, vector<8x32xf32>, vector<32x32xf32> -> vector<32x32xf32>
    %c0_2 = arith.constant 0 : index
    %c0_3 = arith.constant 0 : index
    %c0_4 = arith.constant 0 : index
    %15 = vector.load %arg1[%c0_2, %c0_3, %c0_4] : memref<1x32x32xf32, #tpu.memory_space<vmem>>, vector<1x32x32xf32>
    %16 = vector.shape_cast %14 : vector<32x32xf32> to vector<1x32x32xf32>
    %17 = arith.addf %15, %16 : vector<1x32x32xf32>
    %18 = vector.shape_cast %17 : vector<1x32x32xf32> to vector<32x32xf32>
    %c0_5 = arith.constant 0 : index
    %c0_6 = arith.constant 0 : index
    %19 = vector.load %arg3[%c0_5, %c0_6] : memref<32x32xf32, #tpu.memory_space<vmem>>, vector<32x32xf32>
    %cst_7 = arith.constant dense<0.000000e+00> : vector<32x32xf32>
    %20 = tpu.matmul %18, %19, %cst_7 {dimension_numbers = #tpu.dot_dimension_numbers<[1], [0], [0], [1], [0, 0, 1, 1], [], []>} : vector<32x32xf32>, vector<32x32xf32>, vector<32x32xf32> -> vector<32x32xf32>
    %c0_8 = arith.constant 0 : index
    %c0_9 = arith.constant 0 : index
    %21 = vector.load %arg4[%c0_8, %c0_9] : memref<1x32xf32, #tpu.memory_space<vmem>>, vector<1x32xf32>
    %22 = vector.broadcast %21 : vector<1x32xf32> to vector<32x32xf32>
    %23 = arith.addf %20, %22 : vector<32x32xf32>
    %cst_10 = arith.constant 0.000000e+00 : f32
    %24 = vector.broadcast %cst_10 : f32 to vector<32x32xf32>
    %25 = arith.cmpf ogt, %23, %24 : vector<32x32xf32>
    %cst_11 = arith.constant 0.00999999977 : f32
    %26 = vector.broadcast %cst_11 : f32 to vector<32x32xf32>
    %27 = arith.mulf %26, %23 : vector<32x32xf32>
    %28 = arith.select %25, %23, %27 : vector<32x32xi1>, vector<32x32xf32>
    %c0_12 = arith.constant 0 : index
    %c0_13 = arith.constant 0 : index
    %29 = vector.load %arg5[%c0_12, %c0_13] : memref<1x32xf32, #tpu.memory_space<vmem>>, vector<1x32xf32>
    %30 = vector.broadcast %29 : vector<1x32xf32> to vector<32x32xf32>
    %31 = arith.mulf %28, %30 : vector<32x32xf32>
    %32 = tpu.transpose %31, [1, 0] : vector<32x32xf32> -> vector<32x32xf32>
    %cst_14 = arith.constant dense<0.000000e+00> : vector<32xf32>
    %33 = vector.multi_reduction <add>, %32, %cst_14 [0] : vector<32x32xf32> to vector<32xf32>
    %34 = vector.shape_cast %33 : vector<32xf32> to vector<1x32xf32>
    %35 = vector.shape_cast %34 : vector<1x32xf32> to vector<1x1x32xf32>
    %c0_15 = arith.constant 0 : index
    %c0_16 = arith.constant 0 : index
    %c0_17 = arith.constant 0 : index
    %36 = vector.load %arg6[%c0_15, %c0_16, %c0_17] : memref<1x1x32xf32, #tpu.memory_space<vmem>>, vector<1x1x32xf32>
    %37 = arith.addf %35, %36 : vector<1x1x32xf32>
    %cst_18 = arith.constant dense<0xFF800000> : vector<1x1xf32>
    %38 = vector.multi_reduction <maximumf>, %37, %cst_18 [2] : vector<1x1x32xf32> to vector<1x1xf32>
    %39 = vector.shape_cast %38 : vector<1x1xf32> to vector<1x1x1xf32>
    %40 = vector.broadcast %39 : vector<1x1x1xf32> to vector<1x1x32xf32>
    %41 = arith.subf %37, %40 : vector<1x1x32xf32>
    %42 = math.exp %41 : vector<1x1x32xf32>
    %cst_19 = arith.constant dense<0.000000e+00> : vector<1x1xf32>
    %43 = vector.multi_reduction <add>, %42, %cst_19 [2] : vector<1x1x32xf32> to vector<1x1xf32>
    %44 = vector.shape_cast %43 : vector<1x1xf32> to vector<1x1x1xf32>
    %45 = vector.broadcast %44 : vector<1x1x1xf32> to vector<1x1x32xf32>
    %46 = arith.divf %42, %45 : vector<1x1x32xf32>
    %c0_20 = arith.constant 0 : index
    %c0_21 = arith.constant 0 : index
    %c0_22 = arith.constant 0 : index
    %47 = vector.load %arg7[%c0_20, %c0_21, %c0_22] : memref<1x1x32xf32, #tpu.memory_space<vmem>>, vector<1x1x32xf32>
    tpu.vector_store %arg7[%c0_20, %c0_21, %c0_22], %46 {strides = array<i32>} : memref<1x1x32xf32, #tpu.memory_space<vmem>>, vector<1x1x32xf32>,
    return
  }
  func.func @transform_0(%arg0: i32) -> (i32, i32, i32) {
    %c0_i32 = arith.constant 0 : i32
    %c0_i32_0 = arith.constant 0 : i32
    %c0_i32_1 = arith.constant 0 : i32
    return %arg0, %c0_i32, %c0_i32_0 : i32, i32, i32
  }
  func.func @transform_1(%arg0: i32) -> (i32, i32) {
    %c0_i32 = arith.constant 0 : i32
    %c0_i32_0 = arith.constant 0 : i32
    %c0_i32_1 = arith.constant 0 : i32
    return %c0_i32, %c0_i32_0 : i32, i32
  }
  func.func @transform_2(%arg0: i32) -> (i32, i32) {
    %c0_i32 = arith.constant 0 : i32
    %c0_i32_0 = arith.constant 0 : i32
    %c0_i32_1 = arith.constant 0 : i32
    return %c0_i32, %c0_i32_0 : i32, i32
  }
  func.func @transform_3(%arg0: i32) -> (i32, i32) {
    %c0_i32 = arith.constant 0 : i32
    %c0_i32_0 = arith.constant 0 : i32
    %c0_i32_1 = arith.constant 0 : i32
    return %c0_i32, %c0_i32_0 : i32, i32
  }
  func.func @transform_4(%arg0: i32) -> (i32, i32) {
    %c0_i32 = arith.constant 0 : i32
    %c0_i32_0 = arith.constant 0 : i32
    %c0_i32_1 = arith.constant 0 : i32
    return %c0_i32, %c0_i32_0 : i32, i32
  }
  func.func @transform_5(%arg0: i32) -> (i32, i32, i32) {
    %c0_i32 = arith.constant 0 : i32
    %c0_i32_0 = arith.constant 0 : i32
    %c0_i32_1 = arith.constant 0 : i32
    return %arg0, %c0_i32, %c0_i32_0 : i32, i32, i32
  }
  func.func @transform_6(%arg0: i32) -> (i32, i32, i32) {
    %c0_i32 = arith.constant 0 : i32
    %c0_i32_0 = arith.constant 0 : i32
    %c0_i32_1 = arith.constant 0 : i32
    return %arg0, %c0_i32, %c0_i32_0 : i32, i32, i32
  }
}

</mosaic_0001>

<llo_original>
// kernel: tpu_custom_call.1
$region0: #{tpu_custom_call.1}
  #allocation0 [shape = 'u32[]', space=smem, size = 0x4, offset = 0x4, fixed_abs, tag = 'smem constant byte address 0x4 - core index']
  #allocation1 [shape = 'u32[72,128]{1,0:T(1,128)}', space=vmem, size = 0x9000, scoped, tag = 'internal scratch']
  %s0 = inlined_call_operand.hbm [shape: f32[2,32,32], index: 0, kind: input, shape index: {}]
  %s1 = inlined_call_operand.hbm [shape: f32[8,32], index: 1, kind: input, shape index: {}]
  %s2 = inlined_call_operand.hbm [shape: f32[32,32], index: 2, kind: input, shape index: {}]
  %s3 = inlined_call_operand.vmem [shape: f32[1,32], index: 3, kind: input, shape index: {}]
  %s4 = inlined_call_operand.hbm [shape: f32[1,32], index: 4, kind: input, shape index: {}]
  %s5 = inlined_call_operand.vmem [shape: f32[2,1,32], index: 5, kind: input, shape index: {}]
  %s6 = inlined_call_operand.hbm [shape: f32[2,1,32], index: 6, kind: output, shape index: {}]
  %s7 = sld [smem:[#allocation0]]
  $region73: #{tpu_custom_call.1} parent=0
    _
  %s9 = ssub.s32 1, %s7
  %s10 = scalar_select 0, %s9, %s7
  $region1: #{tpu_custom_call.1} parent=0
    #allocation2 [shape = 'u8[32768]{0}', space=vmem, size = 0x8000, scoped, tag = 'input window, operand 0']
    #allocation3 [shape = 's32[2]{0}', space=sflag, size = 0x8, scoped, tag = 'scoped memory for tpu_custom_call.1']
    #allocation4 [shape = 's32[2]{0}', space=sflag, size = 0x8, scoped, tag = 'scoped memory for tpu_custom_call.1']
    #allocation5 [shape = 'u8[4096]{0}', space=vmem, size = 0x1000, scoped, tag = 'input window, operand 1, single buffered']
    #allocation6 [shape = 's32[1]{0}', space=sflag, size = 0x4, scoped, tag = 'scoped memory for tpu_custom_call.1']
    #allocation7 [shape = 'u8[16384]{0}', space=vmem, size = 0x4000, scoped, tag = 'input window, operand 2, single buffered']
    #allocation8 [shape = 'u8[512]{0}', space=vmem, size = 0x400, scoped, tag = 'input window, operand 4, single buffered']
    #allocation9 [shape = 's32[1]{0}', space=sflag, size = 0x4, scoped, tag = 'scoped memory for tpu_custom_call.1']
    #allocation10 [shape = 'u8[1024]{0}', space=vmem, size = 0x400, scoped, tag = 'output window, operand 0']
    %11 = vsyncpa [#allocation3], 0
    %s12 = scalar_lea.sflag [#allocation3], 1
    %13 = vsyncpa %s12, 0
    %14 = vsyncpa [#allocation6], 0
    %15 = vsyncpa [#allocation9], 0
    %16 = vsyncpa [#allocation4], 0
    %s17 = scalar_lea.sflag [#allocation4], 1
    %18 = vsyncpa %s17, 0
    loop: start=0, step=1, limit=4
    $region2: #{tpu_custom_call.1} parent=1 // loop_pre_header
      _
    $region3: #{tpu_custom_call.1} parent=1 // loop_header
      %s20 = sphi 0, %s24
      %p21 = scmp.ge.s32.totalorder %s20, 4
      %s30 = sphi 0, %s32
      %s33 = sphi 0, %s30
      %s34 = sphi 0, %s33
      %s50 = sphi 0, %s34
      %s54 = sphi 0, %s54
      %s56 = sphi 0, %s54
      %s57 = sphi 0, %s56
      %s71 = sphi 0, %s57
      %s75 = sphi 0, %s75
      %s77 = sphi 0, %s75
      %s78 = sphi 0, %s77
      %s92 = sphi 0, %s78
      %s96 = sphi 0, %s96
      %s98 = sphi 0, %s96
      %s99 = sphi 0, %s98
      %s113 = sphi 0, %s99
      %s117 = sphi 0, %s117
      %s119 = sphi 0, %s117
      %s120 = sphi 0, %s119
      %s134 = sphi 0, %s120
      %s140 = sphi 0, %s142
      %s143 = sphi 0, %s140
      %s144 = sphi 0, %s143
      %s160 = sphi 0, %s144
      %s166 = sphi 0, %s168
      %s169 = sphi 0, %s166
      %s170 = sphi 0, %s169
      %s186 = sphi 0, %s170
    $region4: #{tpu_custom_call.1} parent=1 // loop_header_branch
      %23 = sbr.rel (%p21) target = $region8
    $region5: #{tpu_custom_call.1} parent=1 // loop_body
      %s25 = ssub.s32 %s20, 1
      %s26 = ssub.s32 %s20, 2
      %s27 = sadd.s32 %s20, 1
      %s28 = ssub.s32 %s20, %s27
      %p29 = scmp.eq.s32.totalorder %s28, 0
      %s31 = sadd.s32 %s30, 1
      %s32 = scalar_select %p29, %s30, %s31
      %p35 = pneg %p29
      %p36 = scmp.eq.s32.totalorder %s20, 1
      %p37 = por %p35, %p36
      %p38 = scmp.ne.s32.totalorder %s30, %s33
      %p39 = scmp.eq.s32.totalorder %s20, 0
      %p40 = por %p38, %p39
      %p41 = scmp.ne.s32.totalorder %s30, %s33
      %p42 = scmp.eq.s32.totalorder %s25, 1
      %p43 = por %p41, %p42
      %p44 = scmp.ne.s32.totalorder %s33, %s34
      %p45 = scmp.eq.s32.totalorder %s25, 0
      %p46 = por %p44, %p45
      %p47 = scmp.ne.s32.totalorder %s33, %s34
      %p48 = scmp.eq.s32.totalorder %s26, 1
      %p49 = por %p47, %p48
      %p51 = scmp.ne.s32.totalorder %s34, %s50
      %p52 = scmp.eq.s32.totalorder %s26, 0
      %p53 = por %p51, %p52
      %s55 = sadd.s32 %s54, 1
      %p58 = scmp.eq.s32.totalorder %s20, 1
      %p59 = scmp.ne.s32.totalorder %s54, %s56
      %p60 = scmp.eq.s32.totalorder %s20, 0
      %p61 = por %p59, %p60
      %p62 = scmp.ne.s32.totalorder %s54, %s56
      %p63 = scmp.eq.s32.totalorder %s25, 1
      %p64 = por %p62, %p63
      %p65 = scmp.ne.s32.totalorder %s56, %s57
      %p66 = scmp.eq.s32.totalorder %s25, 0
      %p67 = por %p65, %p66
      %p68 = scmp.ne.s32.totalorder %s56, %s57
      %p69 = scmp.eq.s32.totalorder %s26, 1
      %p70 = por %p68, %p69
      %p72 = scmp.ne.s32.totalorder %s57, %s71
      %p73 = scmp.eq.s32.totalorder %s26, 0
      %p74 = por %p72, %p73
      %s76 = sadd.s32 %s75, 1
      %p79 = scmp.eq.s32.totalorder %s20, 1
      %p80 = scmp.ne.s32.totalorder %s75, %s77
      %p81 = scmp.eq.s32.totalorder %s20, 0
      %p82 = por %p80, %p81
      %p83 = scmp.ne.s32.totalorder %s75, %s77
      %p84 = scmp.eq.s32.totalorder %s25, 1
      %p85 = por %p83, %p84
      %p86 = scmp.ne.s32.totalorder %s77, %s78
      %p87 = scmp.eq.s32.totalorder %s25, 0
      %p88 = por %p86, %p87
      %p89 = scmp.ne.s32.totalorder %s77, %s78
      %p90 = scmp.eq.s32.totalorder %s26, 1
      %p91 = por %p89, %p90
      %p93 = scmp.ne.s32.totalorder %s78, %s92
      %p94 = scmp.eq.s32.totalorder %s26, 0
      %p95 = por %p93, %p94
      %s97 = sadd.s32 %s96, 1
      %p100 = scmp.eq.s32.totalorder %s20, 1
      %p101 = scmp.ne.s32.totalorder %s96, %s98
      %p102 = scmp.eq.s32.totalorder %s20, 0
      %p103 = por %p101, %p102
      %p104 = scmp.ne.s32.totalorder %s96, %s98
      %p105 = scmp.eq.s32.totalorder %s25, 1
      %p106 = por %p104, %p105
      %p107 = scmp.ne.s32.totalorder %s98, %s99
      %p108 = scmp.eq.s32.totalorder %s25, 0
      %p109 = por %p107, %p108
      %p110 = scmp.ne.s32.totalorder %s98, %s99
      %p111 = scmp.eq.s32.totalorder %s26, 1
      %p112 = por %p110, %p111
      %p114 = scmp.ne.s32.totalorder %s99, %s113
      %p115 = scmp.eq.s32.totalorder %s26, 0
      %p116 = por %p114, %p115
      %s118 = sadd.s32 %s117, 1
      %p121 = scmp.eq.s32.totalorder %s20, 1
      %p122 = scmp.ne.s32.totalorder %s117, %s119
      %p123 = scmp.eq.s32.totalorder %s20, 0
      %p124 = por %p122, %p123
      %p125 = scmp.ne.s32.totalorder %s117, %s119
      %p126 = scmp.eq.s32.totalorder %s25, 1
      %p127 = por %p125, %p126
      %p128 = scmp.ne.s32.totalorder %s119, %s120
      %p129 = scmp.eq.s32.totalorder %s25, 0
      %p130 = por %p128, %p129
      %p131 = scmp.ne.s32.totalorder %s119, %s120
      %p132 = scmp.eq.s32.totalorder %s26, 1
      %p133 = por %p131, %p132
      %p135 = scmp.ne.s32.totalorder %s120, %s134
      %p136 = scmp.eq.s32.totalorder %s26, 0
      %p137 = por %p135, %p136
      %s138 = ssub.s32 %s20, %s27
      %p139 = scmp.eq.s32.totalorder %s138, 0
      %s141 = sadd.s32 %s140, 1
      %s142 = scalar_select %p139, %s140, %s141
      %p145 = pneg %p139
      %p146 = scmp.eq.s32.totalorder %s20, 1
      %p147 = por %p145, %p146
      %p148 = scmp.ne.s32.totalorder %s140, %s143
      %p149 = scmp.eq.s32.totalorder %s20, 0
      %p150 = por %p148, %p149
      %p151 = scmp.ne.s32.totalorder %s140, %s143
      %p152 = scmp.eq.s32.totalorder %s25, 1
      %p153 = por %p151, %p152
      %p154 = scmp.ne.s32.totalorder %s143, %s144
      %p155 = scmp.eq.s32.totalorder %s25, 0
      %p156 = por %p154, %p155
      %p157 = scmp.ne.s32.totalorder %s143, %s144
      %p158 = scmp.eq.s32.totalorder %s26, 1
      %p159 = por %p157, %p158
      %p161 = scmp.ne.s32.totalorder %s144, %s160
      %p162 = scmp.eq.s32.totalorder %s26, 0
      %p163 = por %p161, %p162
      %s164 = ssub.s32 %s20, %s27
      %p165 = scmp.eq.s32.totalorder %s164, 0
      %s167 = sadd.s32 %s166, 1
      %s168 = scalar_select %p165, %s166, %s167
      %p171 = pneg %p165
      %p172 = scmp.eq.s32.totalorder %s20, 1
      %p173 = por %p171, %p172
      %p174 = scmp.ne.s32.totalorder %s166, %s169
      %p175 = scmp.eq.s32.totalorder %s20, 0
      %p176 = por %p174, %p175
      %p177 = scmp.ne.s32.totalorder %s166, %s169
      %p178 = scmp.eq.s32.totalorder %s25, 1
      %p179 = por %p177, %p178
      %p180 = scmp.ne.s32.totalorder %s169, %s170
      %p181 = scmp.eq.s32.totalorder %s25, 0
      %p182 = por %p180, %p181
      %p183 = scmp.ne.s32.totalorder %s169, %s170
      %p184 = scmp.eq.s32.totalorder %s26, 1
      %p185 = por %p183, %p184
      %p187 = scmp.ne.s32.totalorder %s170, %s186
      %p188 = scmp.eq.s32.totalorder %s26, 0
      %p189 = por %p187, %p188
      %p190 = scmp.le.s32.totalorder 1, %s20
      %p191 = scmp.lt.s32.totalorder %s20, 3
      %p192 = pnand %p190, %p191
      %p193 = pneg %p192
      // Predicated region
      $region9: #{tpu_custom_call.1} parent=5 // pred_check
        _
      $region10: #{tpu_custom_call.1} parent=5 // pred_check_branch
        %195 = sbr.rel (%p192) target = $region12
      $region11: #{tpu_custom_call.1} parent=5 // pred_region
        %s196 = ssub.s32 %s20, 1
        // Predicated region
        $region13: #{tpu_custom_call.1} parent=11 // pred_check
          %p197 = pneg %p67
        $region14: #{tpu_custom_call.1} parent=11 // pred_check_branch
          %199 = sbr.rel (%p197) target = $region16
        $region15: #{tpu_custom_call.1} parent=11 // pred_region
          %201 = vsyncadd [#allocation6], 0
          %s203 = sshll.u32 %s1, 4
          %s204 = int_to_ptr.hbm [resolvable:$true] %s203
          %s205 = sshll.u32 [#allocation5], 4
          %s206 = int_to_ptr.vmem [resolvable:$true] %s205
          %208 = dma.hbm_to_vmem [thread:$0]  %s204, 128, %s206, [#allocation6]
        $region16: #{tpu_custom_call.1} parent=11 // pred_fallthru
          _
        // Predicated region
        $region17: #{tpu_custom_call.1} parent=11 // pred_check
          %p209 = pneg %p88
        $region18: #{tpu_custom_call.1} parent=11 // pred_check_branch
          %211 = sbr.rel (%p209) target = $region20
        $region19: #{tpu_custom_call.1} parent=11 // pred_region
          %213 = vsyncadd [#allocation6], 0
          %s214 = sshll.u32 %s2, 4
          %s215 = int_to_ptr.hbm [resolvable:$true] %s214
          %s216 = sshll.u32 [#allocation7], 4
          %s217 = int_to_ptr.vmem [resolvable:$true] %s216
          %222 = dma.hbm_to_vmem [thread:$0]  %s215, 512, %s217, [#allocation6], 128, 128, 8
        $region20: #{tpu_custom_call.1} parent=11 // pred_fallthru
          _
        // Predicated region
        $region21: #{tpu_custom_call.1} parent=11 // pred_check
          %p223 = pneg %p109
        $region22: #{tpu_custom_call.1} parent=11 // pred_check_branch
          %225 = sbr.rel (%p223) target = $region24
        $region23: #{tpu_custom_call.1} parent=11 // pred_region
          _
        $region24: #{tpu_custom_call.1} parent=11 // pred_fallthru
          _
        // Predicated region
        $region25: #{tpu_custom_call.1} parent=11 // pred_check
          %p226 = pneg %p130
        $region26: #{tpu_custom_call.1} parent=11 // pred_check_branch
          %228 = sbr.rel (%p226) target = $region28
        $region27: #{tpu_custom_call.1} parent=11 // pred_region
          %230 = vsyncadd [#allocation9], 0
          %s232 = sshll.u32 %s4, 4
          %s233 = int_to_ptr.hbm [resolvable:$true] %s232
          %s234 = sshll.u32 [#allocation8], 4
          %s235 = int_to_ptr.vmem [resolvable:$true] %s234
          %237 = dma.hbm_to_vmem [thread:$0]  %s233, 16, %s235, [#allocation9]
        $region28: #{tpu_custom_call.1} parent=11 // pred_fallthru
          _
      $region12: #{tpu_custom_call.1} parent=5 // pred_fallthru
        _
      %p238 = scmp.lt.s32.totalorder %s20, 2
      // Predicated region
      $region29: #{tpu_custom_call.1} parent=5 // pred_check
        %p239 = pneg %p238
      $region30: #{tpu_custom_call.1} parent=5 // pred_check_branch
        %241 = sbr.rel (%p239) target = $region32
      $region31: #{tpu_custom_call.1} parent=5 // pred_region
        // Predicated region
        $region33: #{tpu_custom_call.1} parent=31 // pred_check
          %p242 = pneg %p40
        $region34: #{tpu_custom_call.1} parent=31 // pred_check_branch
          %244 = sbr.rel (%p242) target = $region36
        $region35: #{tpu_custom_call.1} parent=31 // pred_region
          %s245 = sand.u32 %s30, 1
          %s246 = scalar_lea.sflag [#allocation3], %s245
          %s247 = sand.u32 %s30, 1
          %s248 = smul.addr %s247, 32
          %s249 = scalar_lea.vmem [#allocation2], %s248
          %251 = vsyncadd %s246, 0
          %s252 = smul.addr %s20, 4
          %s253 = smul.addr %s252, 8
          %s254 = scalar_lea.hbm %s0, %s253
          %s255 = sshll.u32 %s254, 4
          %s256 = int_to_ptr.hbm [resolvable:$true] %s255
          %s257 = sshll.u32 %s249, 4
          %s258 = int_to_ptr.vmem [resolvable:$true] %s257
          %263 = dma.hbm_to_vmem [thread:$0]  %s256, 512, %s258, %s246, 128, 128, 8
        $region36: #{tpu_custom_call.1} parent=31 // pred_fallthru
          _
        // Predicated region
        $region37: #{tpu_custom_call.1} parent=31 // pred_check
          %p264 = pneg %p150
        $region38: #{tpu_custom_call.1} parent=31 // pred_check_branch
          %266 = sbr.rel (%p264) target = $region40
        $region39: #{tpu_custom_call.1} parent=31 // pred_region
          %p267 = scmp.lt.s32.totalorder %s20, 1
          %s268 = scalar_select %p267, %s20, 1
          %s269 = scalar_lea.vmem %s5, %s268
        $region40: #{tpu_custom_call.1} parent=31 // pred_fallthru
          _
      $region32: #{tpu_custom_call.1} parent=5 // pred_fallthru
        _
      %p270 = scmp.le.s32.totalorder 1, %s20
      %p271 = scmp.lt.s32.totalorder %s20, 3
      %p272 = pnand %p270, %p271
      %p273 = pneg %p272
      // Predicated region
      $region41: #{tpu_custom_call.1} parent=5 // pred_check
        _
      $region42: #{tpu_custom_call.1} parent=5 // pred_check_branch
        %275 = sbr.rel (%p272) target = $region44
      $region43: #{tpu_custom_call.1} parent=5 // pred_region
        %s276 = ssub.s32 %s20, 1
        %s277 = sand.u32 %s33, 1
        %s278 = scalar_lea.sflag [#allocation3], %s277
        %s279 = sand.u32 %s33, 1
        %s280 = smul.addr %s279, 32
        %s281 = scalar_lea.vmem [#allocation2], %s280
        // Predicated region
        $region45: #{tpu_custom_call.1} parent=43 // pred_check
          %p282 = pneg %p46
        $region46: #{tpu_custom_call.1} parent=43 // pred_check_branch
          %284 = sbr.rel (%p282) target = $region48
        $region47: #{tpu_custom_call.1} parent=43 // pred_region
          %286 = dma.done %s278, 512
        $region48: #{tpu_custom_call.1} parent=43 // pred_fallthru
          _
        // Predicated region
        $region49: #{tpu_custom_call.1} parent=43 // pred_check
          %p287 = pneg %p67
        $region50: #{tpu_custom_call.1} parent=43 // pred_check_branch
          %289 = sbr.rel (%p287) target = $region52
        $region51: #{tpu_custom_call.1} parent=43 // pred_region
          %291 = dma.done [#allocation6], 128
        $region52: #{tpu_custom_call.1} parent=43 // pred_fallthru
          _
        // Predicated region
        $region53: #{tpu_custom_call.1} parent=43 // pred_check
          %p292 = pneg %p88
        $region54: #{tpu_custom_call.1} parent=43 // pred_check_branch
          %294 = sbr.rel (%p292) target = $region56
        $region55: #{tpu_custom_call.1} parent=43 // pred_region
          %296 = dma.done [#allocation6], 512
        $region56: #{tpu_custom_call.1} parent=43 // pred_fallthru
          _
        // Predicated region
        $region57: #{tpu_custom_call.1} parent=43 // pred_check
          %p297 = pneg %p130
        $region58: #{tpu_custom_call.1} parent=43 // pred_check_branch
          %299 = sbr.rel (%p297) target = $region60
        $region59: #{tpu_custom_call.1} parent=43 // pred_region
          %301 = dma.done [#allocation9], 16
        $region60: #{tpu_custom_call.1} parent=43 // pred_fallthru
          _
        %s302 = sand.u32 %s33, 1
        %s303 = scalar_lea.sflag [#allocation3], %s302
        %s304 = sand.u32 %s33, 1
        %s305 = smul.addr %s304, 32
        %s306 = scalar_lea.vmem [#allocation2], %s305
        %p307 = pneg %p46
        %p308 = pneg %p43
        %p309 = pneg %p67
        %p310 = pneg %p64
        %p311 = pneg %p88
        %p312 = pneg %p85
        %p313 = pneg %p109
        %p314 = pneg %p106
        %p315 = pneg %p130
        %p316 = pneg %p127
        %p317 = scmp.lt.s32.totalorder %s25, 1
        %s318 = scalar_select %p317, %s25, 1
        %s319 = scalar_lea.vmem %s5, %s318
        %p320 = pneg %p156
        %p321 = pneg %p153
        %p322 = pneg %p182
        %p323 = pneg %p179
        %s324 = sand.u32 %s169, 1
        %s325 = scalar_lea.sflag [#allocation4], %s324
        %s326 = sand.u32 %s169, 1
        %s327 = scalar_lea.vmem [#allocation10], %s326
        %p328 = scmp.lt.s32.totalorder %s25, 1
        %s329 = scalar_select %p328, %s25, 1
        %s330 = scalar_lea.vmem %s5, %s329
        %v331 = vlaneseq
        %v332 = vshrl.u32 %v331, 7
        %v333 = vadd.s32 %v332, 8
        %v334 = vadd.s32 %v332, 16
        %v335 = vadd.s32 %v332, 24
        %v336 = vlaneseq
        %v337 = vand.u32 %v336, 127
        %v338 = vmul.u32 %v337, 4
        %vm339 = vcmp.ge.s32.totalorder %v332, %v338
        %vm340 = vcmp.ge.s32.totalorder %v333, %v338
        %vm341 = vcmp.ge.s32.totalorder %v334, %v338
        %vm342 = vcmp.ge.s32.totalorder %v335, %v338
        %v343 = vadd.s32 %v337, 1
        %v344 = vmul.u32 %v343, 4
        %vm345 = vcmp.lt.s32.totalorder %v332, %v344
        %vm346 = vcmp.lt.s32.totalorder %v333, %v344
        %vm347 = vcmp.lt.s32.totalorder %v334, %v344
        %vm348 = vcmp.lt.s32.totalorder %v335, %v344
        %vm349 = vmand %vm339, %vm345
        %vm350 = vmand %vm340, %vm346
        %vm351 = vmand %vm341, %vm347
        %vm352 = vmand %vm342, %vm348
        %v353 = vsel %vm349, 1, 0
        %v354 = vsel %vm350, 1, 0
        %v355 = vsel %vm351, 1, 0
        %v356 = vsel %vm352, 1, 0
        %v357 = vcvt.s32.f32 %v353
        %v358 = vcvt.s32.f32 %v354
        %v359 = vcvt.s32.f32 %v355
        %v360 = vcvt.s32.f32 %v356
        %v361 = vld [vmem:[#allocation5] sm:$0xff]
        %vm362 = vcmask 64512
        %v364 = vsel %vm362, %v357, 0
        %v367 = vsel %vm362, %v358, 0
        %v370 = vsel %vm362, %v359, 0
        %v373 = vsel %vm362, %v360, 0
        %375 = vmatpush.msra.mxu0 0.0
        %376 = vmatpush.msra.mxu0 0.0
        %377 = vmatpush.msra.mxu0 0.0
        %378 = vmatpush.msra.mxu0 0.0
        %379 = vmatpush.msra.mxu0 0.0
        %380 = vmatpush.msra.mxu0 0.0
        %381 = vmatpush.msra.mxu0 0.0
        %382 = vmatpush.msra.mxu0 0.0
        %383 = vmatpush.msra.mxu0 0.0
        %384 = vmatpush.msra.mxu0 0.0
        %385 = vmatpush.msra.mxu0 0.0
        %386 = vmatpush.msra.mxu0 0.0
        %387 = vmatpush.msra.mxu0 0.0
        %388 = vmatpush.msra.mxu0 0.0
        %389 = vmatpush.msra.mxu0 0.0
        %390 = vmatpush.msra.mxu0 %v361
        %391 = vmatmul.f32.gmra.mxu0 %v364
        %v392 = vpop.f32.mrf.mxu0
        %v393 = vadd.f32 0.0, %v392
        %394 = vmatmul.f32.gmra.mxu0 %v367
        %v395 = vpop.f32.mrf.mxu0
        %v396 = vadd.f32 0.0, %v395
        %397 = vmatmul.f32.gmra.mxu0 %v370
        %v398 = vpop.f32.mrf.mxu0
        %v399 = vadd.f32 0.0, %v398
        %400 = vmatmul.f32.gmra.mxu0 %v373
        %v401 = vpop.f32.mrf.mxu0
        %v402 = vadd.f32 0.0, %v401
        %403 = vdwg.mxu0
        %v404 = vld [vmem:[%s281] sm:$0xff]
        %v405 = vld [vmem:[%s281 + $0x8] sm:$0xff]
        %v406 = vld [vmem:[%s281 + $0x10] sm:$0xff]
        %v407 = vld [vmem:[%s281 + $0x18] sm:$0xff]
        %v408 = vadd.f32 %v404, %v393
        %v409 = vadd.f32 %v405, %v396
        %v410 = vadd.f32 %v406, %v399
        %v411 = vadd.f32 %v407, %v402
        %v412 = vld [vmem:[#allocation7] sm:$0xff]
        %v413 = vld [vmem:[#allocation7 + $0x8] sm:$0xff]
        %v414 = vld [vmem:[#allocation7 + $0x10] sm:$0xff]
        %v415 = vld [vmem:[#allocation7 + $0x18] sm:$0xff]
        %v416 = vld [vmem:[%s3] sm:$0x1]
        %v418 = vperm.slane %v416, 0
        %vm420 = vcmask 261120
        %v422 = vsel %vm420, %v408, 0
        %v425 = vsel %vm420, %v409, 0
        %v428 = vsel %vm420, %v410, 0
        %v431 = vsel %vm420, %v411, 0
        %433 = vmatpush.msra.mxu0 0.0
        %434 = vmatpush.msra.mxu0 0.0
        %435 = vmatpush.msra.mxu0 0.0
        %436 = vmatpush.msra.mxu0 0.0
        %437 = vmatpush.msra.mxu0 0.0
        %438 = vmatpush.msra.mxu0 0.0
        %439 = vmatpush.msra.mxu0 0.0
        %440 = vmatpush.msra.mxu0 0.0
        %441 = vmatpush.msra.mxu0 0.0
        %442 = vmatpush.msra.mxu0 0.0
        %443 = vmatpush.msra.mxu0 0.0
        %444 = vmatpush.msra.mxu0 0.0
        %445 = vmatpush.msra.mxu0 %v415
        %446 = vmatpush.msra.mxu0 %v414
        %447 = vmatpush.msra.mxu0 %v413
        %448 = vmatpush.msra.mxu0 %v412
        %449 = vmatmul.f32.gmra.mxu0 %v422
        %v450 = vpop.f32.mrf.mxu0
        %v451 = vadd.f32 %v418, %v450
        %452 = vmatmul.f32.gmra.mxu0 %v425
        %v453 = vpop.f32.mrf.mxu0
        %v454 = vadd.f32 %v418, %v453
        %455 = vmatmul.f32.gmra.mxu0 %v428
        %v456 = vpop.f32.mrf.mxu0
        %v457 = vadd.f32 %v418, %v456
        %458 = vmatmul.f32.gmra.mxu0 %v431
        %v459 = vpop.f32.mrf.mxu0
        %v460 = vadd.f32 %v418, %v459
        %461 = vdwg.mxu0
        %vm462 = vcmp.gt.f32.partialorder %v451, 0.0
        %vm463 = vcmp.gt.f32.partialorder %v454, 0.0
        %vm464 = vcmp.gt.f32.partialorder %v457, 0.0
        %vm465 = vcmp.gt.f32.partialorder %v460, 0.0
        %v466 = vmul.f32 %v451, 0.01
        %v467 = vmul.f32 %v454, 0.01
        %v468 = vmul.f32 %v457, 0.01
        %v469 = vmul.f32 %v460, 0.01
        %v470 = vsel %vm462, %v451, %v466
        %v471 = vsel %vm463, %v454, %v467
        %v472 = vsel %vm464, %v457, %v468
        %v473 = vsel %vm465, %v460, %v469
        %v474 = vld [vmem:[#allocation8] sm:$0x1]
        %v476 = vperm.slane %v474, 0
        %v478 = vmul.f32 %v470, %v476
        %v479 = vmul.f32 %v471, %v476
        %v480 = vmul.f32 %v472, %v476
        %v481 = vmul.f32 %v473, %v476
        %482 = vxpose.xlu0.b32.start [1/16] %v478, 128
        %483 = vxpose.xlu0.b32.cont [2/16] %v479, 128
        %484 = vxpose.xlu0.b32.cont [3/16] %v480, 128
        %485 = vxpose.xlu0.b32.cont [4/16] %v481, 128
        %486 = vxpose.xlu0.b32.cont [5/16] 0.0, 128
        %487 = vxpose.xlu0.b32.cont [6/16] 0.0, 128
        %488 = vxpose.xlu0.b32.cont [7/16] 0.0, 128
        %489 = vxpose.xlu0.b32.cont [8/16] 0.0, 128
        %490 = vxpose.xlu0.b32.cont [9/16] 0.0, 128
        %491 = vxpose.xlu0.b32.cont [10/16] 0.0, 128
        %492 = vxpose.xlu0.b32.cont [11/16] 0.0, 128
        %493 = vxpose.xlu0.b32.cont [12/16] 0.0, 128
        %494 = vxpose.xlu0.b32.cont [13/16] 0.0, 128
        %495 = vxpose.xlu0.b32.cont [14/16] 0.0, 128
        %496 = vxpose.xlu0.b32.cont [15/16] 0.0, 128
        %497 = vxpose.xlu0.b32.end [16/16] 0.0, 128
        %v498 = vpop.trf.xlu0
        %v499 = vpop.trf.xlu0
        %v500 = vpop.trf.xlu0
        %v501 = vpop.trf.xlu0
        %v502 = vpop.trf.xlu0
        %v503 = vpop.trf.xlu0
        %v504 = vpop.trf.xlu0
        %v505 = vpop.trf.xlu0
        %v506 = vpop.trf.xlu0
        %v507 = vpop.trf.xlu0
        %v508 = vpop.trf.xlu0
        %v509 = vpop.trf.xlu0
        %v510 = vpop.trf.xlu0
        %v511 = vpop.trf.xlu0
        %v512 = vpop.trf.xlu0
        %v513 = vpop.trf.xlu0
        %v514 = vsel %vm420, %v498, 0.0
        %v515 = vsel %vm420, %v499, 0.0
        %v516 = vadd.f32 %v514, %v515
        %v517 = vsel %vm420, %v500, 0.0
        %v518 = vadd.f32 %v516, %v517
        %v519 = vsel %vm420, %v501, 0.0
        %v520 = vadd.f32 %v518, %v519
        %v521 = vrot.slane %v520, 4
        %v522 = vadd.f32 %v520, %v521
        %v523 = vrot.slane %v522, 2
        %v524 = vadd.f32 %v522, %v523
        %v525 = vrot.slane %v524, 1
        %v526 = vadd.f32 %v524, %v525
        %v527 = vld [vmem:[%s330] sm:$0x1]
        %v528 = vadd.f32 %v526, %v527
        %vm529 = vcmask 253952
        %v530 = vsel %vm529, %v528, -inf
        %531 = vmax.xlane.f32.xlu0 %v530
        %v532 = vpop.xlane.xlu0 %531
        %v533 = vsub.f32 %v528, %v532
        %v534 = vmul.f32 %v533, 1.442695
        %v535 = vpow.pop %v534
        %v536 = vsel %vm529, %v535, 0.0
        %537 = vadd.xlane.f32.xlu0 %v536
        %v538 = vpop.xlane.xlu0 %537
        %v539 = vrcp.pop %v538
        %v540 = vmul.f32 %v538, %v539
        %v541 = vsub.f32 1.0, %v540
        %v542 = vmul.f32 %v539, %v541
        %v543 = vadd.f32 %v539, %v542
        %vm544 = vweird.f32 %v538
        %vm545 = vweird.f32 %v539
        %vm546 = vmor %vm544, %vm545
        %v547 = vsel %vm546, %v539, %v543
        %v548 = vand.u32 2147483647, %v538
        %vm549 = vcmp.eq.f32.partialorder %v548, 8.507059e+37
        %v550 = vand.u32 %v538, 2147483648
        %v551 = vor.u32 1.1754944e-38, %v550
        %v552 = vsel %vm549, %v551, %v547
        %v553 = vmul.f32 %v535, %v552
        %554 = vst.msk [vmem:[%s327] sm:$0x1] %vm529, %v553
        %s555 = sand.u32 %s169, 1
        %s556 = scalar_lea.sflag [#allocation4], %s555
        %s557 = sand.u32 %s169, 1
        %s558 = scalar_lea.vmem [#allocation10], %s557
        // Predicated region
        $region61: #{tpu_custom_call.1} parent=43 // pred_check
          %p559 = pneg %p179
        $region62: #{tpu_custom_call.1} parent=43 // pred_check_branch
          %561 = sbr.rel (%p559) target = $region64
        $region63: #{tpu_custom_call.1} parent=43 // pred_region
          %563 = vsyncadd %s556, 0
          %s564 = scalar_lea.hbm %s6, %s25
          %s566 = sshll.u32 %s558, 4
          %s567 = int_to_ptr.vmem [resolvable:$true] %s566
          %s568 = sshll.u32 %s564, 4
          %s569 = int_to_ptr.hbm [resolvable:$true] %s568
          %571 = dma.vmem_to_hbm [thread:$0]  %s567, 16, %s569, %s556
        $region64: #{tpu_custom_call.1} parent=43 // pred_fallthru
          _
      $region44: #{tpu_custom_call.1} parent=5 // pred_fallthru
        _
      %p572 = scmp.le.s32.totalorder 2, %s20
      // Predicated region
      $region65: #{tpu_custom_call.1} parent=5 // pred_check
        %p573 = pneg %p572
      $region66: #{tpu_custom_call.1} parent=5 // pred_check_branch
        %575 = sbr.rel (%p573) target = $region68
      $region67: #{tpu_custom_call.1} parent=5 // pred_region
        %s576 = ssub.s32 %s20, 2
        // Predicated region
        $region69: #{tpu_custom_call.1} parent=67 // pred_check
          %p577 = pneg %p185
        $region70: #{tpu_custom_call.1} parent=67 // pred_check_branch
          %579 = sbr.rel (%p577) target = $region72
        $region71: #{tpu_custom_call.1} parent=67 // pred_region
          %s580 = sand.u32 %s170, 1
          %s581 = scalar_lea.sflag [#allocation4], %s580
          %s582 = sand.u32 %s170, 1
          %s583 = scalar_lea.vmem [#allocation10], %s582
          %585 = dma.done %s581, 16
        $region72: #{tpu_custom_call.1} parent=67 // pred_fallthru
          _
      $region68: #{tpu_custom_call.1} parent=5 // pred_fallthru
        _
    $region6: #{tpu_custom_call.1} parent=1 // loop_footer
      %s24 = sadd.s32 1, %s20
    $region7: #{tpu_custom_call.1} parent=1 // loop_footer_branch
      %19 = sbr.rel target = $region3
    $region8: #{tpu_custom_call.1} parent=1 // loop_exit
      _
    %586 = vsyncpa [#allocation3], 1
    %s587 = scalar_lea.sflag [#allocation3], 1
    %588 = vsyncpa %s587, 1
    %589 = vsyncpa [#allocation6], 1
    %590 = vsyncpa [#allocation9], 1
    %591 = vsyncpa [#allocation4], 1
    %s592 = scalar_lea.sflag [#allocation4], 1
    %593 = vsyncpa %s592, 1

</llo_original>
